<compile_context>
chip_gen: v5e
topology: v5e:2x2
jax: 0.10.0
libtpu: 0.0.40
codegen_flags: <defaults>
</compile_context>

<pallas_src>
import functools

import jax
import jax.numpy as jnp
from jax.experimental import pallas as pl
from jax.experimental.pallas import tpu as pltpu


def _round_up(n: int, m: int) -> int:
    return ((n + m - 1) // m) * m


def _sublayer_connection_kernel(x_ref, w_ref, b_ref, o_ref, *, eps: float):
    """out = x + ( ((x - mean) / (std + eps)) @ w_folded + b_folded )."""
    x = x_ref[...].astype(jnp.float32)                       # (TM, D)
    d_model = x.shape[-1]

    # --- LayerNorm statistics, one pass over x (unbiased std, eps on std) ---
    s1 = jnp.sum(x, axis=-1, keepdims=True)                  # (TM, 1)
    s2 = jnp.sum(x * x, axis=-1, keepdims=True)              # (TM, 1)
    mean = s1 * (1.0 / d_model)
    # sum((x-mean)^2) == sum(x^2) - D*mean^2 ; clamp tiny negative cancellation.
    var = jnp.maximum(s2 - mean * s1, 0.0) * (1.0 / (d_model - 1))
    inv = pl.reciprocal(jnp.sqrt(var) + eps, approx=False)   # (TM, 1), one recip/row
    xn = (x - mean) * inv                                    # a_2/b_2 folded into w/b

    # --- sublayer: Linear(D -> D) on the MXU ---
    h = jnp.dot(xn, w_ref[...], preferred_element_type=jnp.float32) + b_ref[...]

    # --- dropout (identity in eval mode) + residual ---
    o_ref[...] = (x + h).astype(o_ref.dtype)


def sublayer_connection(x, w, b, a2, b2, *, eps=1e-6, tile_m=1024):
    """x: (B, S, D). w: (D, D), b / a2 / b2: (D,)."""
    B, S, D = x.shape
    tokens = B * S
    x2 = x.reshape(tokens, D)

    # Fold the LayerNorm affine into the Linear (exact math):
    #   (a2*z + b2) @ w + b  ==  z @ (a2[:, None] * w) + (b2 @ w + b)
    w_f = (a2[:, None] * w).astype(jnp.float32)               # (D, D)
    b_f = (b2 @ w + b).reshape(1, D).astype(jnp.float32)      # (1, D)

    # Tile sizing: large MXU/lane-friendly tiles, never larger than the
    # (8-aligned) token count.  Keep at least 2 grid steps when tokens permit
    # so the single "parallel" axis shards across v7x's two TensorCores.
    tm = min(tile_m, _round_up(tokens, 8))
    if tokens > 8:
        tm = min(tm, _round_up(pl.cdiv(tokens, 2), 8))
    grid_m = pl.cdiv(tokens, tm)        # ragged last block handled by Pallas

    kernel = functools.partial(_sublayer_connection_kernel, eps=eps)

    # VMEM estimate: double-buffered x/out tiles + single-buffered weight/bias.
    vmem_bytes = 2 * (2 * tm * D * 4) + D * D * 4 + D * 4
    compiler_kwargs = dict(dimension_semantics=("parallel",))
    if vmem_bytes > 12 * 1024 * 1024:   # only when nearing v5e's 16 MiB default
        compiler_kwargs["vmem_limit_bytes"] = int(vmem_bytes * 3 // 2)

    out = pl.pallas_call(
        kernel,
        out_shape=jax.ShapeDtypeStruct((tokens, D), x.dtype),
        grid_spec=pltpu.PrefetchScalarGridSpec(
            num_scalar_prefetch=0,
            grid=(grid_m,),
            in_specs=[
                pl.BlockSpec((tm, D), lambda i: (i, 0)),              # x tile
                pl.BlockSpec((D, D), lambda i: (0, 0),
                             pipeline_mode=pl.Buffered(1)),           # folded weight (resident)
                pl.BlockSpec((1, D), lambda i: (0, 0),
                             pipeline_mode=pl.Buffered(1)),           # folded bias (resident)
            ],
            out_specs=pl.BlockSpec((tm, D), lambda i: (i, 0)),
        ),
        compiler_params=pltpu.CompilerParams(**compiler_kwargs),
        input_output_aliases={0: 0},    # write the result in place over x2
    )(x2, w_f, b_f)

    return out.reshape(B, S, D)


def _reference(x, w, b, a2, b2, eps=1e-6):
    mean = x.mean(-1, keepdims=True)
    std = jnp.sqrt(((x - mean) ** 2).sum(-1, keepdims=True) / (x.shape[-1] - 1))
    xn = a2 * (x - mean) / (std + eps) + b2
    return x + (xn @ w + b)


if __name__ == "__main__":
    key = jax.random.PRNGKey(0)
    B, S, D = 2, 8, 128   # batch=2, seq=8, d_model=128

    kx, kw, kb = jax.random.split(key, 3)
    x = jax.random.normal(kx, (B, S, D), dtype=jnp.float32)

    # Deterministic parameter init (LayerNorm a_2 = ones, b_2 = zeros;
    # Linear(D, D) as the sublayer).
    w = jax.random.normal(kw, (D, D), dtype=jnp.float32) * 0.02   # sublayer Linear weight
    b = jax.random.normal(kb, (D,), dtype=jnp.float32) * 0.02     # sublayer Linear bias
    a2 = jnp.ones((D,), dtype=jnp.float32)                         # LayerNorm scale
    b2 = jnp.zeros((D,), dtype=jnp.float32)                        # LayerNorm shift

    out = sublayer_connection(x, w, b, a2, b2)
    jax.block_until_ready(out)

    ref = _reference(x, w, b, a2, b2)
    assert out.shape == ref.shape
    assert jnp.allclose(out, ref, atol=1e-4, rtol=1e-4), "mismatch vs reference"

    print("KERNEL_OK")
</pallas_src>

<mosaic_0001>
module attributes {stable_mosaic.version = 11 : i64} {
  func.func @_sublayer_connection_kernel(%arg0: i32, %arg1: memref<8x128xf32, #tpu.memory_space<vmem>>, %arg2: memref<128x128xf32, #tpu.memory_space<vmem>>, %arg3: memref<1x128xf32, #tpu.memory_space<vmem>>, %arg4: memref<8x128xf32, #tpu.memory_space<vmem>>) attributes {dimension_semantics = [#tpu.dimension_semantics<parallel>], iteration_bounds = array<i64: 2>, scalar_prefetch = 0 : i64, scratch_operands = 0 : i64, tpu.core_type = #tpu.core_type<tc>, window_params = [{transform_indices = @transform_0, window_bounds = array<i64: 8, 128>}, {pipeline_mode = #tpu.pipeline_mode<synchronous>, transform_indices = @transform_1, window_bounds = array<i64: 128, 128>}, {pipeline_mode = #tpu.pipeline_mode<synchronous>, transform_indices = @transform_2, window_bounds = array<i64: 1, 128>}, {transform_indices = @transform_3, window_bounds = array<i64: 8, 128>}]} {
    %c0 = arith.constant 0 : index
    %c0_0 = arith.constant 0 : index
    %0 = vector.load %arg1[%c0, %c0_0] : memref<8x128xf32, #tpu.memory_space<vmem>>, vector<8x128xf32>
    %cst = arith.constant dense<0.000000e+00> : vector<8xf32>
    %1 = vector.multi_reduction <add>, %0, %cst [1] : vector<8x128xf32> to vector<8xf32>
    %2 = vector.shape_cast %1 : vector<8xf32> to vector<8x1xf32>
    %3 = arith.mulf %0, %0 : vector<8x128xf32>
    %cst_1 = arith.constant dense<0.000000e+00> : vector<8xf32>
    %4 = vector.multi_reduction <add>, %3, %cst_1 [1] : vector<8x128xf32> to vector<8xf32>
    %5 = vector.shape_cast %4 : vector<8xf32> to vector<8x1xf32>
    %cst_2 = arith.constant 7.812500e-03 : f32
    %6 = vector.broadcast %cst_2 : f32 to vector<8x1xf32>
    %7 = arith.mulf %2, %6 : vector<8x1xf32>
    %8 = arith.mulf %7, %2 : vector<8x1xf32>
    %9 = arith.subf %5, %8 : vector<8x1xf32>
    %cst_3 = arith.constant 0.000000e+00 : f32
    %10 = vector.broadcast %cst_3 : f32 to vector<8x1xf32>
    %11 = arith.maximumf %9, %10 : vector<8x1xf32>
    %cst_4 = arith.constant 0.00787401571 : f32
    %12 = vector.broadcast %cst_4 : f32 to vector<8x1xf32>
    %13 = arith.mulf %11, %12 : vector<8x1xf32>
    %14 = math.sqrt %13 : vector<8x1xf32>
    %cst_5 = arith.constant 9.99999997E-7 : f32
    %15 = vector.broadcast %cst_5 : f32 to vector<8x1xf32>
    %16 = arith.addf %14, %15 : vector<8x1xf32>
    %17 = tpu.reciprocal %16 : vector<8x1xf32> -> vector<8x1xf32>
    %18 = vector.broadcast %7 : vector<8x1xf32> to vector<8x128xf32>
    %19 = arith.subf %0, %18 : vector<8x128xf32>
    %20 = vector.broadcast %17 : vector<8x1xf32> to vector<8x128xf32>
    %21 = arith.mulf %19, %20 : vector<8x128xf32>
    %c0_6 = arith.constant 0 : index
    %c0_7 = arith.constant 0 : index
    %22 = vector.load %arg2[%c0_6, %c0_7] : memref<128x128xf32, #tpu.memory_space<vmem>>, vector<128x128xf32>
    %cst_8 = arith.constant dense<0.000000e+00> : vector<8x128xf32>
    %23 = tpu.matmul %21, %22, %cst_8 {dimension_numbers = #tpu.dot_dimension_numbers<[1], [0], [0], [1], [0, 0, 1, 1], [], []>} : vector<8x128xf32>, vector<128x128xf32>, vector<8x128xf32> -> vector<8x128xf32>
    %c0_9 = arith.constant 0 : index
    %c0_10 = arith.constant 0 : index
    %24 = vector.load %arg3[%c0_9, %c0_10] : memref<1x128xf32, #tpu.memory_space<vmem>>, vector<1x128xf32>
    %25 = vector.broadcast %24 : vector<1x128xf32> to vector<8x128xf32>
    %26 = arith.addf %23, %25 : vector<8x128xf32>
    %27 = arith.addf %0, %26 : vector<8x128xf32>
    %c0_11 = arith.constant 0 : index
    %c0_12 = arith.constant 0 : index
    %28 = vector.load %arg4[%c0_11, %c0_12] : memref<8x128xf32, #tpu.memory_space<vmem>>, vector<8x128xf32>
    tpu.vector_store %arg4[%c0_11, %c0_12], %27 {strides = array<i32>} : memref<8x128xf32, #tpu.memory_space<vmem>>, vector<8x128xf32>,
    return
  }
  func.func @transform_0(%arg0: i32) -> (i32, i32) {
    %c0_i32 = arith.constant 0 : i32
    %c0_i32_0 = arith.constant 0 : i32
    return %arg0, %c0_i32 : i32, i32
  }
  func.func @transform_1(%arg0: i32) -> (i32, i32) {
    %c0_i32 = arith.constant 0 : i32
    %c0_i32_0 = arith.constant 0 : i32
    %c0_i32_1 = arith.constant 0 : i32
    return %c0_i32, %c0_i32_0 : i32, i32
  }
  func.func @transform_2(%arg0: i32) -> (i32, i32) {
    %c0_i32 = arith.constant 0 : i32
    %c0_i32_0 = arith.constant 0 : i32
    %c0_i32_1 = arith.constant 0 : i32
    return %c0_i32, %c0_i32_0 : i32, i32
  }
  func.func @transform_3(%arg0: i32) -> (i32, i32) {
    %c0_i32 = arith.constant 0 : i32
    %c0_i32_0 = arith.constant 0 : i32
    return %arg0, %c0_i32 : i32, i32
  }
}

</mosaic_0001>

<llo_original>
// kernel: tpu_custom_call.1
$region0: #{tpu_custom_call.1}
  #allocation0 [shape = 'u32[]', space=smem, size = 0x4, offset = 0x4, fixed_abs, tag = 'smem constant byte address 0x4 - core index']
  #allocation1 [shape = 'u32[72,128]{1,0:T(1,128)}', space=vmem, size = 0x9000, scoped, tag = 'internal scratch']
  %s0 = inlined_call_operand.hbm [shape: f32[16,128], index: 0, kind: input, shape index: {}, may-alias: {0,3}]
  %s1 = inlined_call_operand.hbm [shape: f32[128,128], index: 1, kind: input, shape index: {}]
  %s2 = inlined_call_operand.vmem [shape: f32[1,128], index: 2, kind: input, shape index: {}]
  %s3 = inlined_call_operand.hbm [shape: f32[16,128], index: 3, kind: output, shape index: {}, may-alias: {0,3}]
  %s4 = sld [smem:[#allocation0]]
  $region53: #{tpu_custom_call.1} parent=0
    _
  %s6 = ssub.s32 1, %s4
  %s7 = scalar_select 0, %s6, %s4
  $region1: #{tpu_custom_call.1} parent=0
    #allocation2 [shape = 'u8[8192]{0}', space=vmem, size = 0x2000, scoped, tag = 'input window, operand 0']
    #allocation3 [shape = 's32[2]{0}', space=sflag, size = 0x8, scoped, tag = 'scoped memory for tpu_custom_call.1']
    #allocation4 [shape = 's32[2]{0}', space=sflag, size = 0x8, scoped, tag = 'scoped memory for tpu_custom_call.1']
    #allocation5 [shape = 'u8[65536]{0}', space=vmem, size = 0x10000, scoped, tag = 'input window, operand 1, single buffered']
    #allocation6 [shape = 's32[1]{0}', space=sflag, size = 0x4, scoped, tag = 'scoped memory for tpu_custom_call.1']
    #allocation7 [shape = 'u8[8192]{0}', space=vmem, size = 0x2000, scoped, tag = 'output window, operand 0']
    %8 = vsyncpa [#allocation3], 0
    %s9 = scalar_lea.sflag [#allocation3], 1
    %10 = vsyncpa %s9, 0
    %11 = vsyncpa [#allocation6], 0
    %12 = vsyncpa [#allocation4], 0
    %s13 = scalar_lea.sflag [#allocation4], 1
    %14 = vsyncpa %s13, 0
    loop: start=0, step=1, limit=4
    $region2: #{tpu_custom_call.1} parent=1 // loop_pre_header
      _
    $region3: #{tpu_custom_call.1} parent=1 // loop_header
      %s16 = sphi 0, %s20
      %p17 = scmp.ge.s32.totalorder %s16, 4
      %s26 = sphi 0, %s28
      %s29 = sphi 0, %s26
      %s30 = sphi 0, %s29
      %s46 = sphi 0, %s30
      %s50 = sphi 0, %s50
      %s52 = sphi 0, %s50
      %s53 = sphi 0, %s52
      %s67 = sphi 0, %s53
      %s71 = sphi 0, %s71
      %s73 = sphi 0, %s71
      %s74 = sphi 0, %s73
      %s88 = sphi 0, %s74
      %s94 = sphi 0, %s96
      %s97 = sphi 0, %s94
      %s98 = sphi 0, %s97
      %s114 = sphi 0, %s98
    $region4: #{tpu_custom_call.1} parent=1 // loop_header_branch
      %19 = sbr.rel (%p17) target = $region8
    $region5: #{tpu_custom_call.1} parent=1 // loop_body
      %s21 = ssub.s32 %s16, 1
      %s22 = ssub.s32 %s16, 2
      %s23 = sadd.s32 %s16, 1
      %s24 = ssub.s32 %s16, %s23
      %p25 = scmp.eq.s32.totalorder %s24, 0
      %s27 = sadd.s32 %s26, 1
      %s28 = scalar_select %p25, %s26, %s27
      %p31 = pneg %p25
      %p32 = scmp.eq.s32.totalorder %s16, 1
      %p33 = por %p31, %p32
      %p34 = scmp.ne.s32.totalorder %s26, %s29
      %p35 = scmp.eq.s32.totalorder %s16, 0
      %p36 = por %p34, %p35
      %p37 = scmp.ne.s32.totalorder %s26, %s29
      %p38 = scmp.eq.s32.totalorder %s21, 1
      %p39 = por %p37, %p38
      %p40 = scmp.ne.s32.totalorder %s29, %s30
      %p41 = scmp.eq.s32.totalorder %s21, 0
      %p42 = por %p40, %p41
      %p43 = scmp.ne.s32.totalorder %s29, %s30
      %p44 = scmp.eq.s32.totalorder %s22, 1
      %p45 = por %p43, %p44
      %p47 = scmp.ne.s32.totalorder %s30, %s46
      %p48 = scmp.eq.s32.totalorder %s22, 0
      %p49 = por %p47, %p48
      %s51 = sadd.s32 %s50, 1
      %p54 = scmp.eq.s32.totalorder %s16, 1
      %p55 = scmp.ne.s32.totalorder %s50, %s52
      %p56 = scmp.eq.s32.totalorder %s16, 0
      %p57 = por %p55, %p56
      %p58 = scmp.ne.s32.totalorder %s50, %s52
      %p59 = scmp.eq.s32.totalorder %s21, 1
      %p60 = por %p58, %p59
      %p61 = scmp.ne.s32.totalorder %s52, %s53
      %p62 = scmp.eq.s32.totalorder %s21, 0
      %p63 = por %p61, %p62
      %p64 = scmp.ne.s32.totalorder %s52, %s53
      %p65 = scmp.eq.s32.totalorder %s22, 1
      %p66 = por %p64, %p65
      %p68 = scmp.ne.s32.totalorder %s53, %s67
      %p69 = scmp.eq.s32.totalorder %s22, 0
      %p70 = por %p68, %p69
      %s72 = sadd.s32 %s71, 1
      %p75 = scmp.eq.s32.totalorder %s16, 1
      %p76 = scmp.ne.s32.totalorder %s71, %s73
      %p77 = scmp.eq.s32.totalorder %s16, 0
      %p78 = por %p76, %p77
      %p79 = scmp.ne.s32.totalorder %s71, %s73
      %p80 = scmp.eq.s32.totalorder %s21, 1
      %p81 = por %p79, %p80
      %p82 = scmp.ne.s32.totalorder %s73, %s74
      %p83 = scmp.eq.s32.totalorder %s21, 0
      %p84 = por %p82, %p83
      %p85 = scmp.ne.s32.totalorder %s73, %s74
      %p86 = scmp.eq.s32.totalorder %s22, 1
      %p87 = por %p85, %p86
      %p89 = scmp.ne.s32.totalorder %s74, %s88
      %p90 = scmp.eq.s32.totalorder %s22, 0
      %p91 = por %p89, %p90
      %s92 = ssub.s32 %s16, %s23
      %p93 = scmp.eq.s32.totalorder %s92, 0
      %s95 = sadd.s32 %s94, 1
      %s96 = scalar_select %p93, %s94, %s95
      %p99 = pneg %p93
      %p100 = scmp.eq.s32.totalorder %s16, 1
      %p101 = por %p99, %p100
      %p102 = scmp.ne.s32.totalorder %s94, %s97
      %p103 = scmp.eq.s32.totalorder %s16, 0
      %p104 = por %p102, %p103
      %p105 = scmp.ne.s32.totalorder %s94, %s97
      %p106 = scmp.eq.s32.totalorder %s21, 1
      %p107 = por %p105, %p106
      %p108 = scmp.ne.s32.totalorder %s97, %s98
      %p109 = scmp.eq.s32.totalorder %s21, 0
      %p110 = por %p108, %p109
      %p111 = scmp.ne.s32.totalorder %s97, %s98
      %p112 = scmp.eq.s32.totalorder %s22, 1
      %p113 = por %p111, %p112
      %p115 = scmp.ne.s32.totalorder %s98, %s114
      %p116 = scmp.eq.s32.totalorder %s22, 0
      %p117 = por %p115, %p116
      %p118 = scmp.le.s32.totalorder 1, %s16
      %p119 = scmp.lt.s32.totalorder %s16, 3
      %p120 = pnand %p118, %p119
      %p121 = pneg %p120
      // Predicated region
      $region9: #{tpu_custom_call.1} parent=5 // pred_check
        _
      $region10: #{tpu_custom_call.1} parent=5 // pred_check_branch
        %123 = sbr.rel (%p120) target = $region12
      $region11: #{tpu_custom_call.1} parent=5 // pred_region
        %s124 = ssub.s32 %s16, 1
        // Predicated region
        $region13: #{tpu_custom_call.1} parent=11 // pred_check
          %p125 = pneg %p63
        $region14: #{tpu_custom_call.1} parent=11 // pred_check_branch
          %127 = sbr.rel (%p125) target = $region16
        $region15: #{tpu_custom_call.1} parent=11 // pred_region
          %129 = vsyncadd [#allocation6], 0
          %s130 = sshll.u32 %s1, 4
          %s131 = int_to_ptr.hbm [resolvable:$true] %s130
          %s132 = sshll.u32 [#allocation5], 4
          %s133 = int_to_ptr.vmem [resolvable:$true] %s132
          %138 = dma.hbm_to_vmem [thread:$0]  %s131, 2048, %s133, [#allocation6], 128, 128, 8
        $region16: #{tpu_custom_call.1} parent=11 // pred_fallthru
          _
        // Predicated region
        $region17: #{tpu_custom_call.1} parent=11 // pred_check
          %p139 = pneg %p84
        $region18: #{tpu_custom_call.1} parent=11 // pred_check_branch
          %141 = sbr.rel (%p139) target = $region20
        $region19: #{tpu_custom_call.1} parent=11 // pred_region
          _
        $region20: #{tpu_custom_call.1} parent=11 // pred_fallthru
          _
      $region12: #{tpu_custom_call.1} parent=5 // pred_fallthru
        _
      %p142 = scmp.lt.s32.totalorder %s16, 2
      // Predicated region
      $region21: #{tpu_custom_call.1} parent=5 // pred_check
        %p143 = pneg %p142
      $region22: #{tpu_custom_call.1} parent=5 // pred_check_branch
        %145 = sbr.rel (%p143) target = $region24
      $region23: #{tpu_custom_call.1} parent=5 // pred_region
        // Predicated region
        $region25: #{tpu_custom_call.1} parent=23 // pred_check
          %p146 = pneg %p36
        $region26: #{tpu_custom_call.1} parent=23 // pred_check_branch
          %148 = sbr.rel (%p146) target = $region28
        $region27: #{tpu_custom_call.1} parent=23 // pred_region
          %s149 = sand.u32 %s26, 1
          %s150 = scalar_lea.sflag [#allocation3], %s149
          %s151 = sand.u32 %s26, 1
          %s152 = smul.addr %s151, 8
          %s153 = scalar_lea.vmem [#allocation2], %s152
          %155 = vsyncadd %s150, 0
          %s156 = smul.addr %s16, 8
          %s157 = scalar_lea.hbm %s0, %s156
          %s159 = sshll.u32 %s157, 4
          %s160 = int_to_ptr.hbm [resolvable:$true] %s159
          %s161 = sshll.u32 %s153, 4
          %s162 = int_to_ptr.vmem [resolvable:$true] %s161
          %164 = dma.hbm_to_vmem [thread:$0]  %s160, 128, %s162, %s150
        $region28: #{tpu_custom_call.1} parent=23 // pred_fallthru
          _
      $region24: #{tpu_custom_call.1} parent=5 // pred_fallthru
        _
      %p165 = scmp.le.s32.totalorder 1, %s16
      %p166 = scmp.lt.s32.totalorder %s16, 3
      %p167 = pnand %p165, %p166
      %p168 = pneg %p167
      // Predicated region
      $region29: #{tpu_custom_call.1} parent=5 // pred_check
        _
      $region30: #{tpu_custom_call.1} parent=5 // pred_check_branch
        %170 = sbr.rel (%p167) target = $region32
      $region31: #{tpu_custom_call.1} parent=5 // pred_region
        %s171 = ssub.s32 %s16, 1
        %s172 = sand.u32 %s29, 1
        %s173 = scalar_lea.sflag [#allocation3], %s172
        %s174 = sand.u32 %s29, 1
        %s175 = smul.addr %s174, 8
        %s176 = scalar_lea.vmem [#allocation2], %s175
        // Predicated region
        $region33: #{tpu_custom_call.1} parent=31 // pred_check
          %p177 = pneg %p42
        $region34: #{tpu_custom_call.1} parent=31 // pred_check_branch
          %179 = sbr.rel (%p177) target = $region36
        $region35: #{tpu_custom_call.1} parent=31 // pred_region
          %181 = dma.done %s173, 128
        $region36: #{tpu_custom_call.1} parent=31 // pred_fallthru
          _
        // Predicated region
        $region37: #{tpu_custom_call.1} parent=31 // pred_check
          %p182 = pneg %p63
        $region38: #{tpu_custom_call.1} parent=31 // pred_check_branch
          %184 = sbr.rel (%p182) target = $region40
        $region39: #{tpu_custom_call.1} parent=31 // pred_region
          %186 = dma.done [#allocation6], 2048
        $region40: #{tpu_custom_call.1} parent=31 // pred_fallthru
          _
        %s187 = sand.u32 %s29, 1
        %s188 = scalar_lea.sflag [#allocation3], %s187
        %s189 = sand.u32 %s29, 1
        %s190 = smul.addr %s189, 8
        %s191 = scalar_lea.vmem [#allocation2], %s190
        %p192 = pneg %p42
        %p193 = pneg %p39
        %p194 = pneg %p63
        %p195 = pneg %p60
        %p196 = pneg %p84
        %p197 = pneg %p81
        %p198 = pneg %p110
        %p199 = pneg %p107
        %s200 = sand.u32 %s97, 1
        %s201 = scalar_lea.sflag [#allocation4], %s200
        %s202 = sand.u32 %s97, 1
        %s203 = smul.addr %s202, 8
        %s204 = scalar_lea.vmem [#allocation7], %s203
        %v205 = vld [vmem:[%s176] sm:$0xff]
        %206 = vadd.xlane.f32.xlu0 %v205
        %v207 = vpop.xlane.xlu0 %206
        %v208 = vmul.f32 %v205, %v205
        %209 = vadd.xlane.f32.xlu0 %v208
        %v210 = vpop.xlane.xlu0 %209
        %v211 = vmul.f32 %v207, 0.0078125
        %v212 = vmul.f32 %v211, %v207
        %v213 = vsub.f32 %v210, %v212
        %v214 = vmax.f32 %v213, 0.0
        %v215 = vmul.f32 %v214, 0.007874016
        %v216 = vrsqrt.pop %v215
        %v217 = vmul.f32 %v216, %v215
        %v218 = vmul.f32 %v217, %v216
        %v219 = vmul.f32 0.5, %v218
        %v220 = vsub.f32 1.5, %v219
        %v221 = vmul.f32 %v216, %v220
        %v222 = vmul.f32 %v215, %v221
        %vm223 = vcmp.eq.f32.partialorder %v215, inf
        %v224 = vsel %vm223, %v215, %v222
        %vm225 = vcmp.eq.f32.partialorder %v215, 0.0
        %v226 = vand.u32 %v215, 2147483648
        %v227 = vsel %vm225, %v226, %v224
        %v228 = vadd.f32 %v227, 1e-06
        %v229 = vrcp.pop %v228
        %v230 = vmul.f32 %v228, %v229
        %v231 = vsub.f32 1.0, %v230
        %v232 = vmul.f32 %v229, %v231
        %v233 = vadd.f32 %v229, %v232
        %vm234 = vweird.f32 %v228
        %vm235 = vweird.f32 %v229
        %vm236 = vmor %vm234, %vm235
        %v237 = vsel %vm236, %v229, %v233
        %v238 = vand.u32 2147483647, %v228
        %vm239 = vcmp.eq.f32.partialorder %v238, 8.507059e+37
        %v240 = vand.u32 %v228, 2147483648
        %v241 = vor.u32 1.1754944e-38, %v240
        %v242 = vsel %vm239, %v241, %v237
        %v243 = vsub.f32 %v205, %v211
        %v244 = vmul.f32 %v243, %v242
        %v245 = vld [vmem:[#allocation5] sm:$0xff]
        %v246 = vld [vmem:[#allocation5 + $0x8] sm:$0xff]
        %v247 = vld [vmem:[#allocation5 + $0x10] sm:$0xff]
        %v248 = vld [vmem:[#allocation5 + $0x18] sm:$0xff]
        %v249 = vld [vmem:[#allocation5 + $0x20] sm:$0xff]
        %v250 = vld [vmem:[#allocation5 + $0x28] sm:$0xff]
        %v251 = vld [vmem:[#allocation5 + $0x30] sm:$0xff]
        %v252 = vld [vmem:[#allocation5 + $0x38] sm:$0xff]
        %v253 = vld [vmem:[#allocation5 + $0x40] sm:$0xff]
        %v254 = vld [vmem:[#allocation5 + $0x48] sm:$0xff]
        %v255 = vld [vmem:[#allocation5 + $0x50] sm:$0xff]
        %v256 = vld [vmem:[#allocation5 + $0x58] sm:$0xff]
        %v257 = vld [vmem:[#allocation5 + $0x60] sm:$0xff]
        %v258 = vld [vmem:[#allocation5 + $0x68] sm:$0xff]
        %v259 = vld [vmem:[#allocation5 + $0x70] sm:$0xff]
        %v260 = vld [vmem:[#allocation5 + $0x78] sm:$0xff]
        %v261 = vld [vmem:[%s2] sm:$0x1]
        %v263 = vperm.slane %v261, 0
        %265 = vmatpush.msra.mxu0 %v260
        %266 = vmatpush.msra.mxu0 %v259
        %267 = vmatpush.msra.mxu0 %v258
        %268 = vmatpush.msra.mxu0 %v257
        %269 = vmatpush.msra.mxu0 %v256
        %270 = vmatpush.msra.mxu0 %v255
        %271 = vmatpush.msra.mxu0 %v254
        %272 = vmatpush.msra.mxu0 %v253
        %273 = vmatpush.msra.mxu0 %v252
        %274 = vmatpush.msra.mxu0 %v251
        %275 = vmatpush.msra.mxu0 %v250
        %276 = vmatpush.msra.mxu0 %v249
        %277 = vmatpush.msra.mxu0 %v248
        %278 = vmatpush.msra.mxu0 %v247
        %279 = vmatpush.msra.mxu0 %v246
        %280 = vmatpush.msra.mxu0 %v245
        %281 = vmatmul.f32.gmra.mxu0 %v244
        %v282 = vpop.f32.mrf.mxu0
        %v283 = vadd.f32 %v263, %v282
        %284 = vdwg.mxu0
        %v285 = vadd.f32 %v205, %v283
        %286 = vst [vmem:[%s204] sm:$0xff] %v285
        %s287 = sand.u32 %s97, 1
        %s288 = scalar_lea.sflag [#allocation4], %s287
        %s289 = sand.u32 %s97, 1
        %s290 = smul.addr %s289, 8
        %s291 = scalar_lea.vmem [#allocation7], %s290
        // Predicated region
        $region41: #{tpu_custom_call.1} parent=31 // pred_check
          %p292 = pneg %p107
        $region42: #{tpu_custom_call.1} parent=31 // pred_check_branch
          %294 = sbr.rel (%p292) target = $region44
        $region43: #{tpu_custom_call.1} parent=31 // pred_region
          %296 = vsyncadd %s288, 0
          %s297 = smul.addr %s21, 8
          %s298 = scalar_lea.hbm %s3, %s297
          %s300 = sshll.u32 %s291, 4
          %s301 = int_to_ptr.vmem [resolvable:$true] %s300
          %s302 = sshll.u32 %s298, 4
          %s303 = int_to_ptr.hbm [resolvable:$true] %s302
          %305 = dma.vmem_to_hbm [thread:$0]  %s301, 128, %s303, %s288
        $region44: #{tpu_custom_call.1} parent=31 // pred_fallthru
          _
      $region32: #{tpu_custom_call.1} parent=5 // pred_fallthru
        _
      %p306 = scmp.le.s32.totalorder 2, %s16
      // Predicated region
      $region45: #{tpu_custom_call.1} parent=5 // pred_check
        %p307 = pneg %p306
      $region46: #{tpu_custom_call.1} parent=5 // pred_check_branch
        %309 = sbr.rel (%p307) target = $region48
      $region47: #{tpu_custom_call.1} parent=5 // pred_region
        %s310 = ssub.s32 %s16, 2
        // Predicated region
        $region49: #{tpu_custom_call.1} parent=47 // pred_check
          %p311 = pneg %p113
        $region50: #{tpu_custom_call.1} parent=47 // pred_check_branch
          %313 = sbr.rel (%p311) target = $region52
        $region51: #{tpu_custom_call.1} parent=47 // pred_region
          %s314 = sand.u32 %s98, 1
          %s315 = scalar_lea.sflag [#allocation4], %s314
          %s316 = sand.u32 %s98, 1
          %s317 = smul.addr %s316, 8
          %s318 = scalar_lea.vmem [#allocation7], %s317
          %320 = dma.done %s315, 128
        $region52: #{tpu_custom_call.1} parent=47 // pred_fallthru
          _
      $region48: #{tpu_custom_call.1} parent=5 // pred_fallthru
        _
    $region6: #{tpu_custom_call.1} parent=1 // loop_footer
      %s20 = sadd.s32 1, %s16
    $region7: #{tpu_custom_call.1} parent=1 // loop_footer_branch
      %15 = sbr.rel target = $region3
    $region8: #{tpu_custom_call.1} parent=1 // loop_exit
      _
    %321 = vsyncpa [#allocation3], 1
    %s322 = scalar_lea.sflag [#allocation3], 1
    %323 = vsyncpa %s322, 1
    %324 = vsyncpa [#allocation6], 1
    %325 = vsyncpa [#allocation4], 1
    %s326 = scalar_lea.sflag [#allocation4], 1
    %327 = vsyncpa %s326, 1

</llo_original>
